<compile_context>
chip_gen: v5e
topology: v5e:2x2
jax: 0.10.0
libtpu: 0.0.40
codegen_flags: <defaults>
</compile_context>

<pallas_src>
import functools

import jax
import jax.numpy as jnp
from jax.experimental import pallas as pl
from jax.experimental.pallas import tpu as pltpu

F_PAD = 128  # lane-dense padded feature width (all feature dims padded to 128)


# -------------------- fused Pallas kernel (entire forward) --------------------

def gin3l_fused_kernel(a_ref, x_ref, w_ref, b_ref, o_ref):
    """relu(relu((A@H)W1+b1)W2+b2) x3  ->  mean-pool  ->  relu(.Wf1+bf1)Wf2+bf2."""
    a = a_ref[...]                                   # [N, N]
    h = x_ref[...]                                   # [N, F_PAD]

    # 3 GIN layers, statically unrolled (tiny fixed trip count).
    for layer in range(3):
        agg = jnp.dot(a, h, preferred_element_type=jnp.float32)
        z = jnp.dot(agg, w_ref[2 * layer],
                    preferred_element_type=jnp.float32) + b_ref[2 * layer]
        z = jnp.maximum(z, 0.0)
        z = jnp.dot(z, w_ref[2 * layer + 1],
                    preferred_element_type=jnp.float32) + b_ref[2 * layer + 1]
        h = jnp.maximum(z, 0.0)

    # Global mean pool (batch == all zeros -> single graph), expressed as an
    # MXU matmul (ones/N row @ H) instead of an XLU cross-sublane reduce.
    n = h.shape[0]
    pool_vec = jnp.full((1, n), 1.0 / n, dtype=jnp.float32)
    pooled = jnp.dot(pool_vec, h, preferred_element_type=jnp.float32)   # [1, F_PAD]

    # FFN head: Linear -> ReLU -> Dropout(identity) -> Linear
    z = jnp.dot(pooled, w_ref[6], preferred_element_type=jnp.float32) + b_ref[6]
    z = jnp.maximum(z, 0.0)
    # TODO(synk): nn.Dropout is treated as identity (eval-mode semantics).
    out = jnp.dot(z, w_ref[7], preferred_element_type=jnp.float32) + b_ref[7]
    o_ref[...] = out.astype(o_ref.dtype)


# -------------------- wrapper --------------------

def _full_spec(shape):
    # single whole-array block resident in VMEM, grid = (1,)
    return pl.BlockSpec(shape, lambda i, _nd=len(shape): (0,) * _nd)


def gin3l_pallas(a_hat, x_pad, w_stack, b_stack, num_classes):
    n, f = x_pad.shape
    flops = 2 * (3 * (n * n * f + 2 * n * f * f) + n * f + 2 * f * f)
    bytes_accessed = 4 * (a_hat.size + x_pad.size + w_stack.size + b_stack.size + f)
    out = pl.pallas_call(
        gin3l_fused_kernel,
        out_shape=jax.ShapeDtypeStruct((1, f), jnp.float32),
        grid=(1,),
        in_specs=[_full_spec(a_hat.shape), _full_spec(x_pad.shape),
                  _full_spec(w_stack.shape), _full_spec(b_stack.shape)],
        out_specs=_full_spec((1, f)),
        compiler_params=pltpu.CompilerParams(dimension_semantics=("arbitrary",)),
        cost_estimate=pl.CostEstimate(flops=flops, transcendentals=0,
                                      bytes_accessed=bytes_accessed),
    )(a_hat, x_pad, w_stack, b_stack)
    return out[:, :num_classes]


# -------------------- glue (plain JAX) --------------------

def build_a_hat(edge_index, num_nodes, eps=0.0):
    """Dense A + (1+eps)I: remove self-loops, then add weighted self-loops
    (matches the custom GINConv: remove_self_loops -> add_self_loops w/ 1+eps)."""
    src, dst = edge_index[0], edge_index[1]
    not_self = (src != dst).astype(jnp.float32)
    a = jnp.zeros((num_nodes, num_nodes), jnp.float32)
    a = a.at[dst, src].add(not_self)                 # out[dst] += x[src]
    a = a + (1.0 + eps) * jnp.eye(num_nodes, dtype=jnp.float32)
    return a


def init_linear(key, fan_in, fan_out):
    kw, kb = jax.random.split(key)
    bound = 1.0 / jnp.sqrt(fan_in)
    w = jax.random.uniform(kw, (fan_in, fan_out), jnp.float32, -bound, bound)
    b = jax.random.uniform(kb, (1, fan_out), jnp.float32, -bound, bound)
    return w, b


def init_params(key, dim_node, dim_hidden, num_classes):
    keys = jax.random.split(key, 8)
    dims = [(dim_node, dim_hidden), (dim_hidden, dim_hidden),    # conv1 mlp
            (dim_hidden, dim_hidden), (dim_hidden, dim_hidden),  # conv2 mlp
            (dim_hidden, dim_hidden), (dim_hidden, dim_hidden),  # conv3 mlp
            (dim_hidden, dim_hidden), (dim_hidden, num_classes)] # ffn head
    return [init_linear(k, fi, fo) for k, (fi, fo) in zip(keys, dims)]


def pack_params(params, f_pad=F_PAD):
    """Zero-pad every Linear to [f_pad, f_pad]/[1, f_pad] and stack -> [8,...]."""
    ws, bs = [], []
    for w, b in params:
        fi, fo = w.shape
        ws.append(jnp.pad(w, ((0, f_pad - fi), (0, f_pad - fo))))
        bs.append(jnp.pad(b, ((0, 0), (0, f_pad - fo))))
    return jnp.stack(ws), jnp.stack(bs)


@functools.partial(jax.jit, static_argnames=("num_classes", "eps"))
def gin_3l_forward(x, edge_index, params, *, num_classes, eps=0.0):
    n, f_in = x.shape
    a_hat = build_a_hat(edge_index, n, eps)
    x_pad = jnp.pad(x, ((0, 0), (0, F_PAD - f_in)))
    w_stack, b_stack = pack_params(params)
    # self.relu1 / self.relus / self.dropout are defined but unused in forward.
    return gin3l_pallas(a_hat, x_pad, w_stack, b_stack, num_classes)  # [1, C]


def gin_3l_reference(x, edge_index, params, num_classes, eps=0.0):
    """Pure-JAX reference for validation."""
    a_hat = build_a_hat(edge_index, x.shape[0], eps)
    h = x
    for layer in range(3):
        w1, b1 = params[2 * layer]
        w2, b2 = params[2 * layer + 1]
        agg = a_hat @ h
        h = jnp.maximum(jnp.maximum(agg @ w1 + b1, 0.0) @ w2 + b2, 0.0)
    pooled = jnp.mean(h, axis=0, keepdims=True)
    wf1, bf1 = params[6]
    wf2, bf2 = params[7]
    return jnp.maximum(pooled @ wf1 + bf1, 0.0) @ wf2 + bf2


# -------------------- main --------------------

if __name__ == "__main__":
    N = 16            # number of nodes
    DIM_NODE = 8      # data_args.dim_node
    DIM_HIDDEN = 32   # data_args.dim_hidden
    NUM_CLASSES = 4   # data_args.num_classes

    key = jax.random.PRNGKey(0)
    k_x, k_p = jax.random.split(key)

    x = jax.random.normal(k_x, (N, DIM_NODE), jnp.float32)

    # deterministic ring graph (both directions), edge_index is [2, E]
    src = jnp.concatenate([jnp.arange(N), (jnp.arange(N) + 1) % N])
    dst = jnp.concatenate([(jnp.arange(N) + 1) % N, jnp.arange(N)])
    edge_index = jnp.stack([src, dst], axis=0).astype(jnp.int32)

    params = init_params(k_p, DIM_NODE, DIM_HIDDEN, NUM_CLASSES)

    out = gin_3l_forward(x, edge_index, params, num_classes=NUM_CLASSES)
    out = jax.block_until_ready(out)
    assert out.shape == (1, NUM_CLASSES), out.shape

    ref = gin_3l_reference(x, edge_index, params, NUM_CLASSES)
    assert jnp.allclose(out, ref, rtol=2e-2, atol=2e-2), (out, ref)

    print("KERNEL_OK")
</pallas_src>

<mosaic_0001>
module attributes {stable_mosaic.version = 11 : i64} {
  func.func @gin3l_fused_kernel(%arg0: i32, %arg1: memref<16x16xf32, #tpu.memory_space<vmem>>, %arg2: memref<16x128xf32, #tpu.memory_space<vmem>>, %arg3: memref<8x128x128xf32, #tpu.memory_space<vmem>>, %arg4: memref<8x1x128xf32, #tpu.memory_space<vmem>>, %arg5: memref<1x128xf32, #tpu.memory_space<vmem>>) attributes {dimension_semantics = [#tpu.dimension_semantics<arbitrary>], iteration_bounds = array<i64: 1>, scalar_prefetch = 0 : i64, scratch_operands = 0 : i64, tpu.core_type = #tpu.core_type<tc>, window_params = [{pipeline_mode = #tpu.pipeline_mode<synchronous>, transform_indices = @transform_0, window_bounds = array<i64: 16, 16>}, {pipeline_mode = #tpu.pipeline_mode<synchronous>, transform_indices = @transform_1, window_bounds = array<i64: 16, 128>}, {pipeline_mode = #tpu.pipeline_mode<synchronous>, transform_indices = @transform_2, window_bounds = array<i64: 8, 128, 128>}, {pipeline_mode = #tpu.pipeline_mode<synchronous>, transform_indices = @transform_3, window_bounds = array<i64: 8, 1, 128>}, {pipeline_mode = #tpu.pipeline_mode<synchronous>, transform_indices = @transform_4, window_bounds = array<i64: 1, 128>}]} {
    %c0 = arith.constant 0 : index
    %c0_0 = arith.constant 0 : index
    %0 = vector.load %arg1[%c0, %c0_0] : memref<16x16xf32, #tpu.memory_space<vmem>>, vector<16x16xf32>
    %c0_1 = arith.constant 0 : index
    %c0_2 = arith.constant 0 : index
    %1 = vector.load %arg2[%c0_1, %c0_2] : memref<16x128xf32, #tpu.memory_space<vmem>>, vector<16x128xf32>
    %cst = arith.constant dense<0.000000e+00> : vector<16x128xf32>
    %2 = tpu.matmul %0, %1, %cst {dimension_numbers = #tpu.dot_dimension_numbers<[1], [0], [0], [1], [0, 0, 1, 1], [], []>} : vector<16x16xf32>, vector<16x128xf32>, vector<16x128xf32> -> vector<16x128xf32>
    %c0_3 = arith.constant 0 : index
    %c0_4 = arith.constant 0 : index
    %c0_5 = arith.constant 0 : index
    %3 = vector.load %arg3[%c0_3, %c0_4, %c0_5] : memref<8x128x128xf32, #tpu.memory_space<vmem>>, vector<1x128x128xf32>
    %4 = vector.shape_cast %3 : vector<1x128x128xf32> to vector<128x128xf32>
    %cst_6 = arith.constant dense<0.000000e+00> : vector<16x128xf32>
    %5 = tpu.matmul %2, %4, %cst_6 {dimension_numbers = #tpu.dot_dimension_numbers<[1], [0], [0], [1], [0, 0, 1, 1], [], []>} : vector<16x128xf32>, vector<128x128xf32>, vector<16x128xf32> -> vector<16x128xf32>
    %c0_7 = arith.constant 0 : index
    %c0_8 = arith.constant 0 : index
    %c0_9 = arith.constant 0 : index
    %6 = vector.load %arg4[%c0_7, %c0_8, %c0_9] : memref<8x1x128xf32, #tpu.memory_space<vmem>>, vector<1x1x128xf32>
    %7 = vector.shape_cast %6 : vector<1x1x128xf32> to vector<1x128xf32>
    %8 = vector.broadcast %7 : vector<1x128xf32> to vector<16x128xf32>
    %9 = arith.addf %5, %8 : vector<16x128xf32>
    %cst_10 = arith.constant 0.000000e+00 : f32
    %10 = vector.broadcast %cst_10 : f32 to vector<16x128xf32>
    %11 = arith.maximumf %9, %10 : vector<16x128xf32>
    %c1 = arith.constant 1 : index
    %c0_11 = arith.constant 0 : index
    %c0_12 = arith.constant 0 : index
    %12 = vector.load %arg3[%c1, %c0_11, %c0_12] : memref<8x128x128xf32, #tpu.memory_space<vmem>>, vector<1x128x128xf32>
    %13 = vector.shape_cast %12 : vector<1x128x128xf32> to vector<128x128xf32>
    %cst_13 = arith.constant dense<0.000000e+00> : vector<16x128xf32>
    %14 = tpu.matmul %11, %13, %cst_13 {dimension_numbers = #tpu.dot_dimension_numbers<[1], [0], [0], [1], [0, 0, 1, 1], [], []>} : vector<16x128xf32>, vector<128x128xf32>, vector<16x128xf32> -> vector<16x128xf32>
    %c1_14 = arith.constant 1 : index
    %c0_15 = arith.constant 0 : index
    %c0_16 = arith.constant 0 : index
    %15 = vector.load %arg4[%c1_14, %c0_15, %c0_16] : memref<8x1x128xf32, #tpu.memory_space<vmem>>, vector<1x1x128xf32>
    %16 = vector.shape_cast %15 : vector<1x1x128xf32> to vector<1x128xf32>
    %17 = vector.broadcast %16 : vector<1x128xf32> to vector<16x128xf32>
    %18 = arith.addf %14, %17 : vector<16x128xf32>
    %cst_17 = arith.constant 0.000000e+00 : f32
    %19 = vector.broadcast %cst_17 : f32 to vector<16x128xf32>
    %20 = arith.maximumf %18, %19 : vector<16x128xf32>
    %cst_18 = arith.constant dense<0.000000e+00> : vector<16x128xf32>
    %21 = tpu.matmul %0, %20, %cst_18 {dimension_numbers = #tpu.dot_dimension_numbers<[1], [0], [0], [1], [0, 0, 1, 1], [], []>} : vector<16x16xf32>, vector<16x128xf32>, vector<16x128xf32> -> vector<16x128xf32>
    %c2 = arith.constant 2 : index
    %c0_19 = arith.constant 0 : index
    %c0_20 = arith.constant 0 : index
    %22 = vector.load %arg3[%c2, %c0_19, %c0_20] : memref<8x128x128xf32, #tpu.memory_space<vmem>>, vector<1x128x128xf32>
    %23 = vector.shape_cast %22 : vector<1x128x128xf32> to vector<128x128xf32>
    %cst_21 = arith.constant dense<0.000000e+00> : vector<16x128xf32>
    %24 = tpu.matmul %21, %23, %cst_21 {dimension_numbers = #tpu.dot_dimension_numbers<[1], [0], [0], [1], [0, 0, 1, 1], [], []>} : vector<16x128xf32>, vector<128x128xf32>, vector<16x128xf32> -> vector<16x128xf32>
    %c2_22 = arith.constant 2 : index
    %c0_23 = arith.constant 0 : index
    %c0_24 = arith.constant 0 : index
    %25 = vector.load %arg4[%c2_22, %c0_23, %c0_24] : memref<8x1x128xf32, #tpu.memory_space<vmem>>, vector<1x1x128xf32>
    %26 = vector.shape_cast %25 : vector<1x1x128xf32> to vector<1x128xf32>
    %27 = vector.broadcast %26 : vector<1x128xf32> to vector<16x128xf32>
    %28 = arith.addf %24, %27 : vector<16x128xf32>
    %cst_25 = arith.constant 0.000000e+00 : f32
    %29 = vector.broadcast %cst_25 : f32 to vector<16x128xf32>
    %30 = arith.maximumf %28, %29 : vector<16x128xf32>
    %c3 = arith.constant 3 : index
    %c0_26 = arith.constant 0 : index
    %c0_27 = arith.constant 0 : index
    %31 = vector.load %arg3[%c3, %c0_26, %c0_27] : memref<8x128x128xf32, #tpu.memory_space<vmem>>, vector<1x128x128xf32>
    %32 = vector.shape_cast %31 : vector<1x128x128xf32> to vector<128x128xf32>
    %cst_28 = arith.constant dense<0.000000e+00> : vector<16x128xf32>
    %33 = tpu.matmul %30, %32, %cst_28 {dimension_numbers = #tpu.dot_dimension_numbers<[1], [0], [0], [1], [0, 0, 1, 1], [], []>} : vector<16x128xf32>, vector<128x128xf32>, vector<16x128xf32> -> vector<16x128xf32>
    %c3_29 = arith.constant 3 : index
    %c0_30 = arith.constant 0 : index
    %c0_31 = arith.constant 0 : index
    %34 = vector.load %arg4[%c3_29, %c0_30, %c0_31] : memref<8x1x128xf32, #tpu.memory_space<vmem>>, vector<1x1x128xf32>
    %35 = vector.shape_cast %34 : vector<1x1x128xf32> to vector<1x128xf32>
    %36 = vector.broadcast %35 : vector<1x128xf32> to vector<16x128xf32>
    %37 = arith.addf %33, %36 : vector<16x128xf32>
    %cst_32 = arith.constant 0.000000e+00 : f32
    %38 = vector.broadcast %cst_32 : f32 to vector<16x128xf32>
    %39 = arith.maximumf %37, %38 : vector<16x128xf32>
    %cst_33 = arith.constant dense<0.000000e+00> : vector<16x128xf32>
    %40 = tpu.matmul %0, %39, %cst_33 {dimension_numbers = #tpu.dot_dimension_numbers<[1], [0], [0], [1], [0, 0, 1, 1], [], []>} : vector<16x16xf32>, vector<16x128xf32>, vector<16x128xf32> -> vector<16x128xf32>
    %c4 = arith.constant 4 : index
    %c0_34 = arith.constant 0 : index
    %c0_35 = arith.constant 0 : index
    %41 = vector.load %arg3[%c4, %c0_34, %c0_35] : memref<8x128x128xf32, #tpu.memory_space<vmem>>, vector<1x128x128xf32>
    %42 = vector.shape_cast %41 : vector<1x128x128xf32> to vector<128x128xf32>
    %cst_36 = arith.constant dense<0.000000e+00> : vector<16x128xf32>
    %43 = tpu.matmul %40, %42, %cst_36 {dimension_numbers = #tpu.dot_dimension_numbers<[1], [0], [0], [1], [0, 0, 1, 1], [], []>} : vector<16x128xf32>, vector<128x128xf32>, vector<16x128xf32> -> vector<16x128xf32>
    %c4_37 = arith.constant 4 : index
    %c0_38 = arith.constant 0 : index
    %c0_39 = arith.constant 0 : index
    %44 = vector.load %arg4[%c4_37, %c0_38, %c0_39] : memref<8x1x128xf32, #tpu.memory_space<vmem>>, vector<1x1x128xf32>
    %45 = vector.shape_cast %44 : vector<1x1x128xf32> to vector<1x128xf32>
    %46 = vector.broadcast %45 : vector<1x128xf32> to vector<16x128xf32>
    %47 = arith.addf %43, %46 : vector<16x128xf32>
    %cst_40 = arith.constant 0.000000e+00 : f32
    %48 = vector.broadcast %cst_40 : f32 to vector<16x128xf32>
    %49 = arith.maximumf %47, %48 : vector<16x128xf32>
    %c5 = arith.constant 5 : index
    %c0_41 = arith.constant 0 : index
    %c0_42 = arith.constant 0 : index
    %50 = vector.load %arg3[%c5, %c0_41, %c0_42] : memref<8x128x128xf32, #tpu.memory_space<vmem>>, vector<1x128x128xf32>
    %51 = vector.shape_cast %50 : vector<1x128x128xf32> to vector<128x128xf32>
    %cst_43 = arith.constant dense<0.000000e+00> : vector<16x128xf32>
    %52 = tpu.matmul %49, %51, %cst_43 {dimension_numbers = #tpu.dot_dimension_numbers<[1], [0], [0], [1], [0, 0, 1, 1], [], []>} : vector<16x128xf32>, vector<128x128xf32>, vector<16x128xf32> -> vector<16x128xf32>
    %c5_44 = arith.constant 5 : index
    %c0_45 = arith.constant 0 : index
    %c0_46 = arith.constant 0 : index
    %53 = vector.load %arg4[%c5_44, %c0_45, %c0_46] : memref<8x1x128xf32, #tpu.memory_space<vmem>>, vector<1x1x128xf32>
    %54 = vector.shape_cast %53 : vector<1x1x128xf32> to vector<1x128xf32>
    %55 = vector.broadcast %54 : vector<1x128xf32> to vector<16x128xf32>
    %56 = arith.addf %52, %55 : vector<16x128xf32>
    %cst_47 = arith.constant 0.000000e+00 : f32
    %57 = vector.broadcast %cst_47 : f32 to vector<16x128xf32>
    %58 = arith.maximumf %56, %57 : vector<16x128xf32>
    %cst_48 = arith.constant 6.250000e-02 : f32
    %59 = vector.broadcast %cst_48 : f32 to vector<1x16xf32>
    %cst_49 = arith.constant dense<0.000000e+00> : vector<1x128xf32>
    %60 = tpu.matmul %59, %58, %cst_49 {dimension_numbers = #tpu.dot_dimension_numbers<[1], [0], [0], [1], [0, 0, 1, 1], [], []>} : vector<1x16xf32>, vector<16x128xf32>, vector<1x128xf32> -> vector<1x128xf32>
    %c6 = arith.constant 6 : index
    %c0_50 = arith.constant 0 : index
    %c0_51 = arith.constant 0 : index
    %61 = vector.load %arg3[%c6, %c0_50, %c0_51] : memref<8x128x128xf32, #tpu.memory_space<vmem>>, vector<1x128x128xf32>
    %62 = vector.shape_cast %61 : vector<1x128x128xf32> to vector<128x128xf32>
    %cst_52 = arith.constant dense<0.000000e+00> : vector<1x128xf32>
    %63 = tpu.matmul %60, %62, %cst_52 {dimension_numbers = #tpu.dot_dimension_numbers<[1], [0], [0], [1], [0, 0, 1, 1], [], []>} : vector<1x128xf32>, vector<128x128xf32>, vector<1x128xf32> -> vector<1x128xf32>
    %c6_53 = arith.constant 6 : index
    %c0_54 = arith.constant 0 : index
    %c0_55 = arith.constant 0 : index
    %64 = vector.load %arg4[%c6_53, %c0_54, %c0_55] : memref<8x1x128xf32, #tpu.memory_space<vmem>>, vector<1x1x128xf32>
    %65 = vector.shape_cast %64 : vector<1x1x128xf32> to vector<1x128xf32>
    %66 = arith.addf %63, %65 : vector<1x128xf32>
    %cst_56 = arith.constant 0.000000e+00 : f32
    %67 = vector.broadcast %cst_56 : f32 to vector<1x128xf32>
    %68 = arith.maximumf %66, %67 : vector<1x128xf32>
    %c7 = arith.constant 7 : index
    %c0_57 = arith.constant 0 : index
    %c0_58 = arith.constant 0 : index
    %69 = vector.load %arg3[%c7, %c0_57, %c0_58] : memref<8x128x128xf32, #tpu.memory_space<vmem>>, vector<1x128x128xf32>
    %70 = vector.shape_cast %69 : vector<1x128x128xf32> to vector<128x128xf32>
    %cst_59 = arith.constant dense<0.000000e+00> : vector<1x128xf32>
    %71 = tpu.matmul %68, %70, %cst_59 {dimension_numbers = #tpu.dot_dimension_numbers<[1], [0], [0], [1], [0, 0, 1, 1], [], []>} : vector<1x128xf32>, vector<128x128xf32>, vector<1x128xf32> -> vector<1x128xf32>
    %c7_60 = arith.constant 7 : index
    %c0_61 = arith.constant 0 : index
    %c0_62 = arith.constant 0 : index
    %72 = vector.load %arg4[%c7_60, %c0_61, %c0_62] : memref<8x1x128xf32, #tpu.memory_space<vmem>>, vector<1x1x128xf32>
    %73 = vector.shape_cast %72 : vector<1x1x128xf32> to vector<1x128xf32>
    %74 = arith.addf %71, %73 : vector<1x128xf32>
    %c0_63 = arith.constant 0 : index
    %c0_64 = arith.constant 0 : index
    %75 = vector.load %arg5[%c0_63, %c0_64] : memref<1x128xf32, #tpu.memory_space<vmem>>, vector<1x128xf32>
    tpu.vector_store %arg5[%c0_63, %c0_64], %74 {strides = array<i32>} : memref<1x128xf32, #tpu.memory_space<vmem>>, vector<1x128xf32>,
    return
  }
  func.func @transform_0(%arg0: i32) -> (i32, i32) {
    %c0_i32 = arith.constant 0 : i32
    %c0_i32_0 = arith.constant 0 : i32
    %c0_i32_1 = arith.constant 0 : i32
    return %c0_i32, %c0_i32_0 : i32, i32
  }
  func.func @transform_1(%arg0: i32) -> (i32, i32) {
    %c0_i32 = arith.constant 0 : i32
    %c0_i32_0 = arith.constant 0 : i32
    %c0_i32_1 = arith.constant 0 : i32
    return %c0_i32, %c0_i32_0 : i32, i32
  }
  func.func @transform_2(%arg0: i32) -> (i32, i32, i32) {
    %c0_i32 = arith.constant 0 : i32
    %c0_i32_0 = arith.constant 0 : i32
    %c0_i32_1 = arith.constant 0 : i32
    %c0_i32_2 = arith.constant 0 : i32
    return %c0_i32, %c0_i32_0, %c0_i32_1 : i32, i32, i32
  }
  func.func @transform_3(%arg0: i32) -> (i32, i32, i32) {
    %c0_i32 = arith.constant 0 : i32
    %c0_i32_0 = arith.constant 0 : i32
    %c0_i32_1 = arith.constant 0 : i32
    %c0_i32_2 = arith.constant 0 : i32
    return %c0_i32, %c0_i32_0, %c0_i32_1 : i32, i32, i32
  }
  func.func @transform_4(%arg0: i32) -> (i32, i32) {
    %c0_i32 = arith.constant 0 : i32
    %c0_i32_0 = arith.constant 0 : i32
    %c0_i32_1 = arith.constant 0 : i32
    return %c0_i32, %c0_i32_0 : i32, i32
  }
}

</mosaic_0001>

<llo_original>
// kernel: gin_3l_forward.1
$region0: #{gin_3l_forward.1}
  #allocation0 [shape = 'u32[]', space=smem, size = 0x4, offset = 0x4, fixed_abs, tag = 'smem constant byte address 0x4 - core index']
  #allocation1 [shape = 'u32[72,128]{1,0:T(1,128)}', space=vmem, size = 0x9000, scoped, tag = 'internal scratch']
  %s0 = inlined_call_operand.vmem [shape: f32[16,16], index: 0, kind: input, shape index: {}]
  %s1 = inlined_call_operand.vmem [shape: f32[16,128], index: 1, kind: input, shape index: {}]
  %s2 = inlined_call_operand.vmem [shape: f32[8,128,128], index: 2, kind: input, shape index: {}]
  %s3 = inlined_call_operand.vmem [shape: f32[8,1,128], index: 3, kind: input, shape index: {}]
  %s4 = inlined_call_operand.hbm [shape: f32[1,128], index: 4, kind: output, shape index: {}]
  %s5 = sld [smem:[#allocation0]]
  $region26: #{gin_3l_forward.1} parent=0
    _
  %s7 = ssub.s32 1, %s5
  %s8 = scalar_select 0, %s7, %s5
  $region1: #{gin_3l_forward.1} parent=0
    #allocation2 [shape = 'u8[512]{0}', space=vmem, size = 0x400, scoped, tag = 'output window, operand 0, single buffered']
    #allocation3 [shape = 's32[1]{0}', space=sflag, size = 0x4, scoped, tag = 'scoped memory for gin_3l_forward.1']
    %9 = vsyncpa [#allocation3], 0
    // Predicated region
    $region2: #{gin_3l_forward.1} parent=1 // pred_check
      _
    $region3: #{gin_3l_forward.1} parent=1 // pred_check_branch
      %11 = sbr.rel (0) target = $region5
    $region4: #{gin_3l_forward.1} parent=1 // pred_region
      _
    $region5: #{gin_3l_forward.1} parent=1 // pred_fallthru
      _
    // Predicated region
    $region6: #{gin_3l_forward.1} parent=1 // pred_check
      _
    $region7: #{gin_3l_forward.1} parent=1 // pred_check_branch
      %13 = sbr.rel (0) target = $region9
    $region8: #{gin_3l_forward.1} parent=1 // pred_region
      _
    $region9: #{gin_3l_forward.1} parent=1 // pred_fallthru
      _
    // Predicated region
    $region10: #{gin_3l_forward.1} parent=1 // pred_check
      _
    $region11: #{gin_3l_forward.1} parent=1 // pred_check_branch
      %15 = sbr.rel (0) target = $region13
    $region12: #{gin_3l_forward.1} parent=1 // pred_region
      _
    $region13: #{gin_3l_forward.1} parent=1 // pred_fallthru
      _
    // Predicated region
    $region14: #{gin_3l_forward.1} parent=1 // pred_check
      _
    $region15: #{gin_3l_forward.1} parent=1 // pred_check_branch
      %17 = sbr.rel (0) target = $region17
    $region16: #{gin_3l_forward.1} parent=1 // pred_region
      _
    $region17: #{gin_3l_forward.1} parent=1 // pred_fallthru
      _
    %v18 = vld [vmem:[%s0] sm:$0xff]
    %v19 = vld [vmem:[%s0 + $0x8] sm:$0xff]
    %v20 = vld [vmem:[%s1] sm:$0xff]
    %v21 = vld [vmem:[%s1 + $0x8] sm:$0xff]
    %vm22 = vcmask 130048
    %v24 = vsel %vm22, %v18, 0
    %v27 = vsel %vm22, %v19, 0
    %29 = vmatpush.msra.mxu0 0.0
    %30 = vmatpush.msra.mxu0 0.0
    %31 = vmatpush.msra.mxu0 0.0
    %32 = vmatpush.msra.mxu0 0.0
    %33 = vmatpush.msra.mxu0 0.0
    %34 = vmatpush.msra.mxu0 0.0
    %35 = vmatpush.msra.mxu0 0.0
    %36 = vmatpush.msra.mxu0 0.0
    %37 = vmatpush.msra.mxu0 0.0
    %38 = vmatpush.msra.mxu0 0.0
    %39 = vmatpush.msra.mxu0 0.0
    %40 = vmatpush.msra.mxu0 0.0
    %41 = vmatpush.msra.mxu0 0.0
    %42 = vmatpush.msra.mxu0 0.0
    %43 = vmatpush.msra.mxu0 %v21
    %44 = vmatpush.msra.mxu0 %v20
    %45 = vmatmul.f32.gmra.mxu0 %v24
    %v46 = vpop.f32.mrf.mxu0
    %v47 = vadd.f32 0.0, %v46
    %48 = vmatmul.f32.gmra.mxu0 %v27
    %v49 = vpop.f32.mrf.mxu0
    %v50 = vadd.f32 0.0, %v49
    %51 = vdwg.mxu0
    %v52 = vld [vmem:[%s2] sm:$0xff]
    %v53 = vld [vmem:[%s2 + $0x8] sm:$0xff]
    %v54 = vld [vmem:[%s2 + $0x10] sm:$0xff]
    %v55 = vld [vmem:[%s2 + $0x18] sm:$0xff]
    %v56 = vld [vmem:[%s2 + $0x20] sm:$0xff]
    %v57 = vld [vmem:[%s2 + $0x28] sm:$0xff]
    %v58 = vld [vmem:[%s2 + $0x30] sm:$0xff]
    %v59 = vld [vmem:[%s2 + $0x38] sm:$0xff]
    %v60 = vld [vmem:[%s2 + $0x40] sm:$0xff]
    %v61 = vld [vmem:[%s2 + $0x48] sm:$0xff]
    %v62 = vld [vmem:[%s2 + $0x50] sm:$0xff]
    %v63 = vld [vmem:[%s2 + $0x58] sm:$0xff]
    %v64 = vld [vmem:[%s2 + $0x60] sm:$0xff]
    %v65 = vld [vmem:[%s2 + $0x68] sm:$0xff]
    %v66 = vld [vmem:[%s2 + $0x70] sm:$0xff]
    %v67 = vld [vmem:[%s2 + $0x78] sm:$0xff]
    %v68 = vld [vmem:[%s3] sm:$0x1]
    %v70 = vperm.slane %v68, 0
    %72 = vmatpush.msra.mxu0 %v67
    %73 = vmatpush.msra.mxu0 %v66
    %74 = vmatpush.msra.mxu0 %v65
    %75 = vmatpush.msra.mxu0 %v64
    %76 = vmatpush.msra.mxu0 %v63
    %77 = vmatpush.msra.mxu0 %v62
    %78 = vmatpush.msra.mxu0 %v61
    %79 = vmatpush.msra.mxu0 %v60
    %80 = vmatpush.msra.mxu0 %v59
    %81 = vmatpush.msra.mxu0 %v58
    %82 = vmatpush.msra.mxu0 %v57
    %83 = vmatpush.msra.mxu0 %v56
    %84 = vmatpush.msra.mxu0 %v55
    %85 = vmatpush.msra.mxu0 %v54
    %86 = vmatpush.msra.mxu0 %v53
    %87 = vmatpush.msra.mxu0 %v52
    %88 = vmatmul.f32.gmra.mxu0 %v47
    %v89 = vpop.f32.mrf.mxu0
    %v90 = vadd.f32 %v70, %v89
    %91 = vmatmul.f32.gmra.mxu0 %v50
    %v92 = vpop.f32.mrf.mxu0
    %v93 = vadd.f32 %v70, %v92
    %94 = vdwg.mxu0
    %v95 = vmax.f32 %v90, 0.0
    %v96 = vmax.f32 %v93, 0.0
    %s97 = scalar_lea.vmem %s2, 128
    %v98 = vld [vmem:[%s97] sm:$0xff]
    %v99 = vld [vmem:[%s97 + $0x8] sm:$0xff]
    %v100 = vld [vmem:[%s97 + $0x10] sm:$0xff]
    %v101 = vld [vmem:[%s97 + $0x18] sm:$0xff]
    %v102 = vld [vmem:[%s97 + $0x20] sm:$0xff]
    %v103 = vld [vmem:[%s97 + $0x28] sm:$0xff]
    %v104 = vld [vmem:[%s97 + $0x30] sm:$0xff]
    %v105 = vld [vmem:[%s97 + $0x38] sm:$0xff]
    %v106 = vld [vmem:[%s97 + $0x40] sm:$0xff]
    %v107 = vld [vmem:[%s97 + $0x48] sm:$0xff]
    %v108 = vld [vmem:[%s97 + $0x50] sm:$0xff]
    %v109 = vld [vmem:[%s97 + $0x58] sm:$0xff]
    %v110 = vld [vmem:[%s97 + $0x60] sm:$0xff]
    %v111 = vld [vmem:[%s97 + $0x68] sm:$0xff]
    %v112 = vld [vmem:[%s97 + $0x70] sm:$0xff]
    %v113 = vld [vmem:[%s97 + $0x78] sm:$0xff]
    %s114 = scalar_lea.vmem %s3, 1
    %v115 = vld [vmem:[%s114] sm:$0x1]
    %v117 = vperm.slane %v115, 0
    %119 = vmatpush.msra.mxu0 %v113
    %120 = vmatpush.msra.mxu0 %v112
    %121 = vmatpush.msra.mxu0 %v111
    %122 = vmatpush.msra.mxu0 %v110
    %123 = vmatpush.msra.mxu0 %v109
    %124 = vmatpush.msra.mxu0 %v108
    %125 = vmatpush.msra.mxu0 %v107
    %126 = vmatpush.msra.mxu0 %v106
    %127 = vmatpush.msra.mxu0 %v105
    %128 = vmatpush.msra.mxu0 %v104
    %129 = vmatpush.msra.mxu0 %v103
    %130 = vmatpush.msra.mxu0 %v102
    %131 = vmatpush.msra.mxu0 %v101
    %132 = vmatpush.msra.mxu0 %v100
    %133 = vmatpush.msra.mxu0 %v99
    %134 = vmatpush.msra.mxu0 %v98
    %135 = vmatmul.f32.gmra.mxu0 %v95
    %v136 = vpop.f32.mrf.mxu0
    %v137 = vadd.f32 %v117, %v136
    %138 = vmatmul.f32.gmra.mxu0 %v96
    %v139 = vpop.f32.mrf.mxu0
    %v140 = vadd.f32 %v117, %v139
    %141 = vdwg.mxu0
    %v142 = vmax.f32 %v137, 0.0
    %v143 = vmax.f32 %v140, 0.0
    %144 = vmatpush.msra.mxu0 0.0
    %145 = vmatpush.msra.mxu0 0.0
    %146 = vmatpush.msra.mxu0 0.0
    %147 = vmatpush.msra.mxu0 0.0
    %148 = vmatpush.msra.mxu0 0.0
    %149 = vmatpush.msra.mxu0 0.0
    %150 = vmatpush.msra.mxu0 0.0
    %151 = vmatpush.msra.mxu0 0.0
    %152 = vmatpush.msra.mxu0 0.0
    %153 = vmatpush.msra.mxu0 0.0
    %154 = vmatpush.msra.mxu0 0.0
    %155 = vmatpush.msra.mxu0 0.0
    %156 = vmatpush.msra.mxu0 0.0
    %157 = vmatpush.msra.mxu0 0.0
    %158 = vmatpush.msra.mxu0 %v143
    %159 = vmatpush.msra.mxu0 %v142
    %160 = vmatmul.f32.gmra.mxu0 %v24
    %v161 = vpop.f32.mrf.mxu0
    %v162 = vadd.f32 0.0, %v161
    %163 = vmatmul.f32.gmra.mxu0 %v27
    %v164 = vpop.f32.mrf.mxu0
    %v165 = vadd.f32 0.0, %v164
    %166 = vdwg.mxu0
    %s167 = scalar_lea.vmem %s2, 256
    %v168 = vld [vmem:[%s167] sm:$0xff]
    %v169 = vld [vmem:[%s167 + $0x8] sm:$0xff]
    %v170 = vld [vmem:[%s167 + $0x10] sm:$0xff]
    %v171 = vld [vmem:[%s167 + $0x18] sm:$0xff]
    %v172 = vld [vmem:[%s167 + $0x20] sm:$0xff]
    %v173 = vld [vmem:[%s167 + $0x28] sm:$0xff]
    %v174 = vld [vmem:[%s167 + $0x30] sm:$0xff]
    %v175 = vld [vmem:[%s167 + $0x38] sm:$0xff]
    %v176 = vld [vmem:[%s167 + $0x40] sm:$0xff]
    %v177 = vld [vmem:[%s167 + $0x48] sm:$0xff]
    %v178 = vld [vmem:[%s167 + $0x50] sm:$0xff]
    %v179 = vld [vmem:[%s167 + $0x58] sm:$0xff]
    %v180 = vld [vmem:[%s167 + $0x60] sm:$0xff]
    %v181 = vld [vmem:[%s167 + $0x68] sm:$0xff]
    %v182 = vld [vmem:[%s167 + $0x70] sm:$0xff]
    %v183 = vld [vmem:[%s167 + $0x78] sm:$0xff]
    %s184 = scalar_lea.vmem %s3, 2
    %v185 = vld [vmem:[%s184] sm:$0x1]
    %v187 = vperm.slane %v185, 0
    %189 = vmatpush.msra.mxu0 %v183
    %190 = vmatpush.msra.mxu0 %v182
    %191 = vmatpush.msra.mxu0 %v181
    %192 = vmatpush.msra.mxu0 %v180
    %193 = vmatpush.msra.mxu0 %v179
    %194 = vmatpush.msra.mxu0 %v178
    %195 = vmatpush.msra.mxu0 %v177
    %196 = vmatpush.msra.mxu0 %v176
    %197 = vmatpush.msra.mxu0 %v175
    %198 = vmatpush.msra.mxu0 %v174
    %199 = vmatpush.msra.mxu0 %v173
    %200 = vmatpush.msra.mxu0 %v172
    %201 = vmatpush.msra.mxu0 %v171
    %202 = vmatpush.msra.mxu0 %v170
    %203 = vmatpush.msra.mxu0 %v169
    %204 = vmatpush.msra.mxu0 %v168
    %205 = vmatmul.f32.gmra.mxu0 %v162
    %v206 = vpop.f32.mrf.mxu0
    %v207 = vadd.f32 %v187, %v206
    %208 = vmatmul.f32.gmra.mxu0 %v165
    %v209 = vpop.f32.mrf.mxu0
    %v210 = vadd.f32 %v187, %v209
    %211 = vdwg.mxu0
    %v212 = vmax.f32 %v207, 0.0
    %v213 = vmax.f32 %v210, 0.0
    %s214 = scalar_lea.vmem %s2, 384
    %v215 = vld [vmem:[%s214] sm:$0xff]
    %v216 = vld [vmem:[%s214 + $0x8] sm:$0xff]
    %v217 = vld [vmem:[%s214 + $0x10] sm:$0xff]
    %v218 = vld [vmem:[%s214 + $0x18] sm:$0xff]
    %v219 = vld [vmem:[%s214 + $0x20] sm:$0xff]
    %v220 = vld [vmem:[%s214 + $0x28] sm:$0xff]
    %v221 = vld [vmem:[%s214 + $0x30] sm:$0xff]
    %v222 = vld [vmem:[%s214 + $0x38] sm:$0xff]
    %v223 = vld [vmem:[%s214 + $0x40] sm:$0xff]
    %v224 = vld [vmem:[%s214 + $0x48] sm:$0xff]
    %v225 = vld [vmem:[%s214 + $0x50] sm:$0xff]
    %v226 = vld [vmem:[%s214 + $0x58] sm:$0xff]
    %v227 = vld [vmem:[%s214 + $0x60] sm:$0xff]
    %v228 = vld [vmem:[%s214 + $0x68] sm:$0xff]
    %v229 = vld [vmem:[%s214 + $0x70] sm:$0xff]
    %v230 = vld [vmem:[%s214 + $0x78] sm:$0xff]
    %s231 = scalar_lea.vmem %s3, 3
    %v232 = vld [vmem:[%s231] sm:$0x1]
    %v234 = vperm.slane %v232, 0
    %236 = vmatpush.msra.mxu0 %v230
    %237 = vmatpush.msra.mxu0 %v229
    %238 = vmatpush.msra.mxu0 %v228
    %239 = vmatpush.msra.mxu0 %v227
    %240 = vmatpush.msra.mxu0 %v226
    %241 = vmatpush.msra.mxu0 %v225
    %242 = vmatpush.msra.mxu0 %v224
    %243 = vmatpush.msra.mxu0 %v223
    %244 = vmatpush.msra.mxu0 %v222
    %245 = vmatpush.msra.mxu0 %v221
    %246 = vmatpush.msra.mxu0 %v220
    %247 = vmatpush.msra.mxu0 %v219
    %248 = vmatpush.msra.mxu0 %v218
    %249 = vmatpush.msra.mxu0 %v217
    %250 = vmatpush.msra.mxu0 %v216
    %251 = vmatpush.msra.mxu0 %v215
    %252 = vmatmul.f32.gmra.mxu0 %v212
    %v253 = vpop.f32.mrf.mxu0
    %v254 = vadd.f32 %v234, %v253
    %255 = vmatmul.f32.gmra.mxu0 %v213
    %v256 = vpop.f32.mrf.mxu0
    %v257 = vadd.f32 %v234, %v256
    %258 = vdwg.mxu0
    %v259 = vmax.f32 %v254, 0.0
    %v260 = vmax.f32 %v257, 0.0
    %261 = vmatpush.msra.mxu0 0.0
    %262 = vmatpush.msra.mxu0 0.0
    %263 = vmatpush.msra.mxu0 0.0
    %264 = vmatpush.msra.mxu0 0.0
    %265 = vmatpush.msra.mxu0 0.0
    %266 = vmatpush.msra.mxu0 0.0
    %267 = vmatpush.msra.mxu0 0.0
    %268 = vmatpush.msra.mxu0 0.0
    %269 = vmatpush.msra.mxu0 0.0
    %270 = vmatpush.msra.mxu0 0.0
    %271 = vmatpush.msra.mxu0 0.0
    %272 = vmatpush.msra.mxu0 0.0
    %273 = vmatpush.msra.mxu0 0.0
    %274 = vmatpush.msra.mxu0 0.0
    %275 = vmatpush.msra.mxu0 %v260
    %276 = vmatpush.msra.mxu0 %v259
    %277 = vmatmul.f32.gmra.mxu0 %v24
    %v278 = vpop.f32.mrf.mxu0
    %v279 = vadd.f32 0.0, %v278
    %280 = vmatmul.f32.gmra.mxu0 %v27
    %v281 = vpop.f32.mrf.mxu0
    %v282 = vadd.f32 0.0, %v281
    %283 = vdwg.mxu0
    %s284 = scalar_lea.vmem %s2, 512
    %v285 = vld [vmem:[%s284] sm:$0xff]
    %v286 = vld [vmem:[%s284 + $0x8] sm:$0xff]
    %v287 = vld [vmem:[%s284 + $0x10] sm:$0xff]
    %v288 = vld [vmem:[%s284 + $0x18] sm:$0xff]
    %v289 = vld [vmem:[%s284 + $0x20] sm:$0xff]
    %v290 = vld [vmem:[%s284 + $0x28] sm:$0xff]
    %v291 = vld [vmem:[%s284 + $0x30] sm:$0xff]
    %v292 = vld [vmem:[%s284 + $0x38] sm:$0xff]
    %v293 = vld [vmem:[%s284 + $0x40] sm:$0xff]
    %v294 = vld [vmem:[%s284 + $0x48] sm:$0xff]
    %v295 = vld [vmem:[%s284 + $0x50] sm:$0xff]
    %v296 = vld [vmem:[%s284 + $0x58] sm:$0xff]
    %v297 = vld [vmem:[%s284 + $0x60] sm:$0xff]
    %v298 = vld [vmem:[%s284 + $0x68] sm:$0xff]
    %v299 = vld [vmem:[%s284 + $0x70] sm:$0xff]
    %v300 = vld [vmem:[%s284 + $0x78] sm:$0xff]
    %s301 = scalar_lea.vmem %s3, 4
    %v302 = vld [vmem:[%s301] sm:$0x1]
    %v304 = vperm.slane %v302, 0
    %306 = vmatpush.msra.mxu0 %v300
    %307 = vmatpush.msra.mxu0 %v299
    %308 = vmatpush.msra.mxu0 %v298
    %309 = vmatpush.msra.mxu0 %v297
    %310 = vmatpush.msra.mxu0 %v296
    %311 = vmatpush.msra.mxu0 %v295
    %312 = vmatpush.msra.mxu0 %v294
    %313 = vmatpush.msra.mxu0 %v293
    %314 = vmatpush.msra.mxu0 %v292
    %315 = vmatpush.msra.mxu0 %v291
    %316 = vmatpush.msra.mxu0 %v290
    %317 = vmatpush.msra.mxu0 %v289
    %318 = vmatpush.msra.mxu0 %v288
    %319 = vmatpush.msra.mxu0 %v287
    %320 = vmatpush.msra.mxu0 %v286
    %321 = vmatpush.msra.mxu0 %v285
    %322 = vmatmul.f32.gmra.mxu0 %v279
    %v323 = vpop.f32.mrf.mxu0
    %v324 = vadd.f32 %v304, %v323
    %325 = vmatmul.f32.gmra.mxu0 %v282
    %v326 = vpop.f32.mrf.mxu0
    %v327 = vadd.f32 %v304, %v326
    %328 = vdwg.mxu0
    %v329 = vmax.f32 %v324, 0.0
    %v330 = vmax.f32 %v327, 0.0
    %s331 = scalar_lea.vmem %s2, 640
    %v332 = vld [vmem:[%s331] sm:$0xff]
    %v333 = vld [vmem:[%s331 + $0x8] sm:$0xff]
    %v334 = vld [vmem:[%s331 + $0x10] sm:$0xff]
    %v335 = vld [vmem:[%s331 + $0x18] sm:$0xff]
    %v336 = vld [vmem:[%s331 + $0x20] sm:$0xff]
    %v337 = vld [vmem:[%s331 + $0x28] sm:$0xff]
    %v338 = vld [vmem:[%s331 + $0x30] sm:$0xff]
    %v339 = vld [vmem:[%s331 + $0x38] sm:$0xff]
    %v340 = vld [vmem:[%s331 + $0x40] sm:$0xff]
    %v341 = vld [vmem:[%s331 + $0x48] sm:$0xff]
    %v342 = vld [vmem:[%s331 + $0x50] sm:$0xff]
    %v343 = vld [vmem:[%s331 + $0x58] sm:$0xff]
    %v344 = vld [vmem:[%s331 + $0x60] sm:$0xff]
    %v345 = vld [vmem:[%s331 + $0x68] sm:$0xff]
    %v346 = vld [vmem:[%s331 + $0x70] sm:$0xff]
    %v347 = vld [vmem:[%s331 + $0x78] sm:$0xff]
    %s348 = scalar_lea.vmem %s3, 5
    %v349 = vld [vmem:[%s348] sm:$0x1]
    %v351 = vperm.slane %v349, 0
    %353 = vmatpush.msra.mxu0 %v347
    %354 = vmatpush.msra.mxu0 %v346
    %355 = vmatpush.msra.mxu0 %v345
    %356 = vmatpush.msra.mxu0 %v344
    %357 = vmatpush.msra.mxu0 %v343
    %358 = vmatpush.msra.mxu0 %v342
    %359 = vmatpush.msra.mxu0 %v341
    %360 = vmatpush.msra.mxu0 %v340
    %361 = vmatpush.msra.mxu0 %v339
    %362 = vmatpush.msra.mxu0 %v338
    %363 = vmatpush.msra.mxu0 %v337
    %364 = vmatpush.msra.mxu0 %v336
    %365 = vmatpush.msra.mxu0 %v335
    %366 = vmatpush.msra.mxu0 %v334
    %367 = vmatpush.msra.mxu0 %v333
    %368 = vmatpush.msra.mxu0 %v332
    %369 = vmatmul.f32.gmra.mxu0 %v329
    %v370 = vpop.f32.mrf.mxu0
    %v371 = vadd.f32 %v351, %v370
    %372 = vmatmul.f32.gmra.mxu0 %v330
    %v373 = vpop.f32.mrf.mxu0
    %v374 = vadd.f32 %v351, %v373
    %375 = vdwg.mxu0
    %v376 = vmax.f32 %v371, 0.0
    %v377 = vmax.f32 %v374, 0.0
    %v379 = vsel %vm22, 0.0625, 0
    %381 = vmatpush.msra.mxu0 0.0
    %382 = vmatpush.msra.mxu0 0.0
    %383 = vmatpush.msra.mxu0 0.0
    %384 = vmatpush.msra.mxu0 0.0
    %385 = vmatpush.msra.mxu0 0.0
    %386 = vmatpush.msra.mxu0 0.0
    %387 = vmatpush.msra.mxu0 0.0
    %388 = vmatpush.msra.mxu0 0.0
    %389 = vmatpush.msra.mxu0 0.0
    %390 = vmatpush.msra.mxu0 0.0
    %391 = vmatpush.msra.mxu0 0.0
    %392 = vmatpush.msra.mxu0 0.0
    %393 = vmatpush.msra.mxu0 0.0
    %394 = vmatpush.msra.mxu0 0.0
    %395 = vmatpush.msra.mxu0 %v377
    %396 = vmatpush.msra.mxu0 %v376
    %397 = vmatmul.f32.gmra.mxu0 %v379
    %v398 = vpop.f32.mrf.mxu0
    %v399 = vadd.f32 0.0, %v398
    %400 = vdwg.mxu0
    %s401 = scalar_lea.vmem %s2, 768
    %v402 = vld [vmem:[%s401] sm:$0xff]
    %v403 = vld [vmem:[%s401 + $0x8] sm:$0xff]
    %v404 = vld [vmem:[%s401 + $0x10] sm:$0xff]
    %v405 = vld [vmem:[%s401 + $0x18] sm:$0xff]
    %v406 = vld [vmem:[%s401 + $0x20] sm:$0xff]
    %v407 = vld [vmem:[%s401 + $0x28] sm:$0xff]
    %v408 = vld [vmem:[%s401 + $0x30] sm:$0xff]
    %v409 = vld [vmem:[%s401 + $0x38] sm:$0xff]
    %v410 = vld [vmem:[%s401 + $0x40] sm:$0xff]
    %v411 = vld [vmem:[%s401 + $0x48] sm:$0xff]
    %v412 = vld [vmem:[%s401 + $0x50] sm:$0xff]
    %v413 = vld [vmem:[%s401 + $0x58] sm:$0xff]
    %v414 = vld [vmem:[%s401 + $0x60] sm:$0xff]
    %v415 = vld [vmem:[%s401 + $0x68] sm:$0xff]
    %v416 = vld [vmem:[%s401 + $0x70] sm:$0xff]
    %v417 = vld [vmem:[%s401 + $0x78] sm:$0xff]
    %s418 = scalar_lea.vmem %s3, 6
    %v419 = vld [vmem:[%s418] sm:$0x1]
    %420 = vmatpush.msra.mxu0 %v417
    %421 = vmatpush.msra.mxu0 %v416
    %422 = vmatpush.msra.mxu0 %v415
    %423 = vmatpush.msra.mxu0 %v414
    %424 = vmatpush.msra.mxu0 %v413
    %425 = vmatpush.msra.mxu0 %v412
    %426 = vmatpush.msra.mxu0 %v411
    %427 = vmatpush.msra.mxu0 %v410
    %428 = vmatpush.msra.mxu0 %v409
    %429 = vmatpush.msra.mxu0 %v408
    %430 = vmatpush.msra.mxu0 %v407
    %431 = vmatpush.msra.mxu0 %v406
    %432 = vmatpush.msra.mxu0 %v405
    %433 = vmatpush.msra.mxu0 %v404
    %434 = vmatpush.msra.mxu0 %v403
    %435 = vmatpush.msra.mxu0 %v402
    %436 = vmatmul.f32.gmra.mxu0 %v399
    %v437 = vpop.f32.mrf.mxu0
    %v438 = vadd.f32 %v419, %v437
    %439 = vdwg.mxu0
    %v440 = vmax.f32 %v438, 0.0
    %s441 = scalar_lea.vmem %s2, 896
    %v442 = vld [vmem:[%s441] sm:$0xff]
    %v443 = vld [vmem:[%s441 + $0x8] sm:$0xff]
    %v444 = vld [vmem:[%s441 + $0x10] sm:$0xff]
    %v445 = vld [vmem:[%s441 + $0x18] sm:$0xff]
    %v446 = vld [vmem:[%s441 + $0x20] sm:$0xff]
    %v447 = vld [vmem:[%s441 + $0x28] sm:$0xff]
    %v448 = vld [vmem:[%s441 + $0x30] sm:$0xff]
    %v449 = vld [vmem:[%s441 + $0x38] sm:$0xff]
    %v450 = vld [vmem:[%s441 + $0x40] sm:$0xff]
    %v451 = vld [vmem:[%s441 + $0x48] sm:$0xff]
    %v452 = vld [vmem:[%s441 + $0x50] sm:$0xff]
    %v453 = vld [vmem:[%s441 + $0x58] sm:$0xff]
    %v454 = vld [vmem:[%s441 + $0x60] sm:$0xff]
    %v455 = vld [vmem:[%s441 + $0x68] sm:$0xff]
    %v456 = vld [vmem:[%s441 + $0x70] sm:$0xff]
    %v457 = vld [vmem:[%s441 + $0x78] sm:$0xff]
    %s458 = scalar_lea.vmem %s3, 7
    %v459 = vld [vmem:[%s458] sm:$0x1]
    %460 = vmatpush.msra.mxu0 %v457
    %461 = vmatpush.msra.mxu0 %v456
    %462 = vmatpush.msra.mxu0 %v455
    %463 = vmatpush.msra.mxu0 %v454
    %464 = vmatpush.msra.mxu0 %v453
    %465 = vmatpush.msra.mxu0 %v452
    %466 = vmatpush.msra.mxu0 %v451
    %467 = vmatpush.msra.mxu0 %v450
    %468 = vmatpush.msra.mxu0 %v449
    %469 = vmatpush.msra.mxu0 %v448
    %470 = vmatpush.msra.mxu0 %v447
    %471 = vmatpush.msra.mxu0 %v446
    %472 = vmatpush.msra.mxu0 %v445
    %473 = vmatpush.msra.mxu0 %v444
    %474 = vmatpush.msra.mxu0 %v443
    %475 = vmatpush.msra.mxu0 %v442
    %476 = vmatmul.f32.gmra.mxu0 %v440
    %v477 = vpop.f32.mrf.mxu0
    %v478 = vadd.f32 %v459, %v477
    %479 = vdwg.mxu0
    %480 = vst [vmem:[#allocation2] sm:$0x1] %v478
    // Predicated region
    $region18: #{gin_3l_forward.1} parent=1 // pred_check
      _
    $region19: #{gin_3l_forward.1} parent=1 // pred_check_branch
      %482 = sbr.rel (0) target = $region21
    $region20: #{gin_3l_forward.1} parent=1 // pred_region
      %484 = vsyncadd [#allocation3], 0
      %s486 = sshll.u32 [#allocation2], 4
      %s487 = int_to_ptr.vmem [resolvable:$true] %s486
      %s488 = sshll.u32 %s4, 4
      %s489 = int_to_ptr.hbm [resolvable:$true] %s488
      %491 = dma.vmem_to_hbm [thread:$0]  %s487, 16, %s489, [#allocation3]
    $region21: #{gin_3l_forward.1} parent=1 // pred_fallthru
      _
    // Predicated region
    $region22: #{gin_3l_forward.1} parent=1 // pred_check
      _
    $region23: #{gin_3l_forward.1} parent=1 // pred_check_branch
      %493 = sbr.rel (0) target = $region25
    $region24: #{gin_3l_forward.1} parent=1 // pred_region
      %495 = dma.done [#allocation3], 16
    $region25: #{gin_3l_forward.1} parent=1 // pred_fallthru
      _
    %496 = vsyncpa [#allocation3], 1

</llo_original>
